<compile_context>
chip_gen: v7x
topology: tpu7x:2x2x1
jax: 0.10.0
libtpu: 0.0.40
codegen_flags: <defaults>
</compile_context>

<pallas_src>
import functools
import math

import jax
import jax.numpy as jnp
from jax import lax
from jax.experimental import pallas as pl
from jax.experimental.pallas import tpu as pltpu


_LANE_ALIGN = 256      # multiple of 256 fills the v6e/v7x MXU N dim (and 128 on v5e)
_MAX_TILE_B = 2048     # large tiles amortize per-grid-step overhead; VMEM stays tiny


def _mlp_kernel(n_layers, sigmoid, matmul_dtype, *refs):
    """Fused MLP forward on one batch tile.

    refs = (x_t, W1, b1, ..., Wk, bk, out_t)
      x_t   : (TB, in_dim)   batch-major input tile (no wrapper transpose)
      Wi    : (out_i, in_i)  weights (PyTorch layout, pre-cast to matmul_dtype)
      bi    : (out_i, 1)     f32 biases, broadcast along the lane (batch) axis
      out_t : (1, TB)        output tile, lane-dense
    """
    x_ref = refs[0]
    out_ref = refs[-1]
    p = refs[1:-1]

    x = x_ref[...]
    if x.dtype != matmul_dtype:
        x = x.astype(matmul_dtype)

    # Layer 1: contract the feature (last) dims of W1:(o1,in) and x:(TB,in)
    # -> (o1, TB).  Activations stay feature-major so the batch dimension
    # rides the 128-lane axis for every subsequent matmul and the store.
    h = lax.dot_general(p[0][...], x, (((1,), (1,)), ((), ())),
                        preferred_element_type=jnp.float32) + p[1][...]
    if n_layers > 1:   # hidden layers are nn.Sequential(nn.Linear, nn.ReLU())
        h = jnp.maximum(h, 0.0)

    for li in range(1, n_layers):
        w = p[2 * li][...]
        b = p[2 * li + 1][...]
        if matmul_dtype != jnp.float32:
            h = h.astype(matmul_dtype)
        h = jnp.dot(w, h, preferred_element_type=jnp.float32) + b
        if li < n_layers - 1:
            h = jnp.maximum(h, 0.0)

    if sigmoid:
        h = jax.nn.sigmoid(h)
    out_ref[...] = h.astype(out_ref.dtype)


def _pick_tiling(B, tile_b):
    """Return (tile_b, b_pad) with tile_b a multiple of 256, b_pad % tile_b == 0.

    Auto mode targets big tiles (<= _MAX_TILE_B) while keeping >= 2 tiles so
    the 'parallel' grid axis can be sharded across v7x's two TensorCores.
    """
    if tile_b is not None:
        tile_b = _LANE_ALIGN * max(1, math.ceil(int(tile_b) / _LANE_ALIGN))
        n_tiles = max(1, math.ceil(B / tile_b))
        return tile_b, n_tiles * tile_b

    units = max(1, math.ceil(B / _LANE_ALIGN))          # 256-wide batch units
    if units <= 1:
        return _LANE_ALIGN, _LANE_ALIGN                  # one small tile
    max_units_per_tile = _MAX_TILE_B // _LANE_ALIGN      # 8
    n_tiles = max(2, math.ceil(units / max_units_per_tile))
    units_per_tile = math.ceil(units / n_tiles)
    tile_b = units_per_tile * _LANE_ALIGN
    return tile_b, n_tiles * tile_b


def nnet_forward(x, params, *, sigmoid=False, tile_b=None,
                 matmul_dtype=jnp.float32):
    """Run the NNet forward pass as a single pipelined Pallas kernel.

    x      : (B, input_dim) float32  (PyTorch nn.Linear input layout)
    params : list of (W, b) with W: (out, in), b: (out, 1)
    Returns (B, 1) float32, matching the PyTorch module's output layout.
    """
    B, in_dim = x.shape
    n_layers = len(params)
    out_dim = params[-1][0].shape[0]  # == 1 (last_layer = nn.Linear(h[-1], 1))

    tile_b, b_pad = _pick_tiling(B, tile_b)
    n_tiles = b_pad // tile_b

    if b_pad != B:
        # Batch-major pad: contiguous append on the major axis (cheap), no
        # relayout of the dominant input stream.  Padded rows produce garbage
        # output that is sliced off below.
        x = jnp.pad(x, ((0, b_pad - B), (0, 0)))

    # Pre-cast weights once in the wrapper (true hoist: they are VMEM-resident
    # across all grid steps via constant index_maps).  Biases stay f32: the
    # bias add happens on the f32 accumulator anyway.
    flat = []
    for (w, b) in params:
        flat += [w.astype(matmul_dtype), b.astype(jnp.float32)]

    kernel = functools.partial(_mlp_kernel, n_layers, sigmoid, matmul_dtype)

    # x / out stream along the batch grid (auto double-buffered); weights and
    # biases use constant index maps so they are DMA'd once.
    in_specs = [pl.BlockSpec((tile_b, in_dim), lambda i: (i, 0))]
    for (w, b) in params:
        in_specs.append(pl.BlockSpec(w.shape, lambda i: (0, 0)))
        in_specs.append(pl.BlockSpec(b.shape, lambda i: (0, 0)))
    out_specs = pl.BlockSpec((out_dim, tile_b), lambda i: (0, i))

    # Advisory cost estimate so XLA schedules surrounding ops around the call.
    param_bytes = sum(int(a.size) * a.dtype.itemsize for a in flat)
    flops = 2 * b_pad * sum(w.shape[0] * w.shape[1] for (w, _) in params)
    cost = pl.CostEstimate(
        flops=flops,
        transcendentals=(b_pad * out_dim) if sigmoid else 0,
        bytes_accessed=int(x.size) * x.dtype.itemsize + param_bytes
                       + b_pad * out_dim * 4,
    )

    out_t = pl.pallas_call(
        kernel,
        out_shape=jax.ShapeDtypeStruct((out_dim, b_pad), jnp.float32),
        grid=(n_tiles,),
        in_specs=in_specs,
        out_specs=out_specs,
        compiler_params=pltpu.CompilerParams(
            dimension_semantics=("parallel",)),
        cost_estimate=cost,
    )(x, *flat)

    # Back to PyTorch (B, 1) layout; drop batch padding.  The output is tiny
    # (1 x B) so this transpose is negligible.
    return out_t[:, :B].T


def init_nnet_params(key, input_dim, hidden_layer_sizes):
    """PyTorch nn.Linear default init: U(-1/sqrt(in), 1/sqrt(in)).

    W is stored (out, in) (native PyTorch layout); b as (out, 1) so it
    broadcasts along the lane (batch) axis inside the kernel.
    """
    sizes = [input_dim] + list(hidden_layer_sizes) + [1]
    params = []
    for in_f, out_f in zip(sizes[:-1], sizes[1:]):
        key, kw, kb = jax.random.split(key, 3)
        bound = 1.0 / float(in_f) ** 0.5
        w = jax.random.uniform(kw, (out_f, in_f), jnp.float32, -bound, bound)
        b = jax.random.uniform(kb, (out_f, 1), jnp.float32, -bound, bound)
        params.append((w, b))
    return params


def nnet_reference(x, params, *, sigmoid=False):
    """Plain-JAX reference of the same forward pass (batch-major layout)."""
    h = x
    n = len(params)
    for i, (w, b) in enumerate(params):
        h = h @ w.T + b.T
        if i < n - 1:
            h = jnp.maximum(h, 0.0)
    if sigmoid:
        h = jax.nn.sigmoid(h)
    return h


if __name__ == "__main__":
    key = jax.random.PRNGKey(0)
    key, kx = jax.random.split(key)

    # Shapes consistent with the module: NNet(input_dim=4, hidden=[32, 32]).
    # Batch of 512 -> two 256-wide lane-dense tiles (splittable across v7x's
    # two TensorCores) while the model itself stays small.
    batch = 512
    input_dim = 4
    hidden_layer_sizes = [32, 32]
    sigmoid = False  # module default

    x = jax.random.normal(kx, (batch, input_dim), dtype=jnp.float32)
    params = init_nnet_params(key, input_dim, hidden_layer_sizes)

    out = nnet_forward(x, params, sigmoid=sigmoid)
    out = jax.block_until_ready(out)

    ref = nnet_reference(x, params, sigmoid=sigmoid)
    assert out.shape == (batch, 1)
    assert jnp.allclose(out, ref, atol=1e-5, rtol=1e-5)

    # Also check the sigmoid head and a batch that needs lane padding
    # (B=200 -> one 256-wide tile with a masked-off tail).
    out_s = jax.block_until_ready(
        nnet_forward(x[:200], params, sigmoid=True))
    ref_s = nnet_reference(x[:200], params, sigmoid=True)
    assert out_s.shape == (200, 1)
    assert jnp.allclose(out_s, ref_s, atol=1e-5, rtol=1e-5)

    # Exercise an explicit user tile override (rounded to a 256 multiple).
    out_t = jax.block_until_ready(nnet_forward(x, params, tile_b=512))
    assert jnp.allclose(out_t, ref, atol=1e-5, rtol=1e-5)

    print("KERNEL_OK")
</pallas_src>

<mosaic_0001>
module attributes {stable_mosaic.version = 11 : i64} {
  func.func @_mlp_kernel(%arg0: i32, %arg1: memref<256x4xf32, #tpu.memory_space<vmem>>, %arg2: memref<32x4xf32, #tpu.memory_space<vmem>>, %arg3: memref<32x1xf32, #tpu.memory_space<vmem>>, %arg4: memref<32x32xf32, #tpu.memory_space<vmem>>, %arg5: memref<32x1xf32, #tpu.memory_space<vmem>>, %arg6: memref<1x32xf32, #tpu.memory_space<vmem>>, %arg7: memref<1x1xf32, #tpu.memory_space<vmem>>, %arg8: memref<1x256xf32, #tpu.memory_space<vmem>>) attributes {dimension_semantics = [#tpu.dimension_semantics<parallel>], iteration_bounds = array<i64: 2>, scalar_prefetch = 0 : i64, scratch_operands = 0 : i64, tpu.core_type = #tpu.core_type<tc>, window_params = [{transform_indices = @transform_0, window_bounds = array<i64: 256, 4>}, {pipeline_mode = #tpu.pipeline_mode<synchronous>, transform_indices = @transform_1, window_bounds = array<i64: 32, 4>}, {pipeline_mode = #tpu.pipeline_mode<synchronous>, transform_indices = @transform_2, window_bounds = array<i64: 32, 1>}, {pipeline_mode = #tpu.pipeline_mode<synchronous>, transform_indices = @transform_3, window_bounds = array<i64: 32, 32>}, {pipeline_mode = #tpu.pipeline_mode<synchronous>, transform_indices = @transform_4, window_bounds = array<i64: 32, 1>}, {pipeline_mode = #tpu.pipeline_mode<synchronous>, transform_indices = @transform_5, window_bounds = array<i64: 1, 32>}, {pipeline_mode = #tpu.pipeline_mode<synchronous>, transform_indices = @transform_6, window_bounds = array<i64: 1, 1>}, {transform_indices = @transform_7, window_bounds = array<i64: 1, 256>}]} {
    %c0 = arith.constant 0 : index
    %c0_0 = arith.constant 0 : index
    %0 = vector.load %arg1[%c0, %c0_0] : memref<256x4xf32, #tpu.memory_space<vmem>>, vector<256x4xf32>
    %c0_1 = arith.constant 0 : index
    %c0_2 = arith.constant 0 : index
    %1 = vector.load %arg2[%c0_1, %c0_2] : memref<32x4xf32, #tpu.memory_space<vmem>>, vector<32x4xf32>
    %cst = arith.constant dense<0.000000e+00> : vector<32x256xf32>
    %2 = tpu.matmul %1, %0, %cst {dimension_numbers = #tpu.dot_dimension_numbers<[1], [1], [0], [0], [0, 0, 1, 0], [], []>} : vector<32x4xf32>, vector<256x4xf32>, vector<32x256xf32> -> vector<32x256xf32>
    %c0_3 = arith.constant 0 : index
    %c0_4 = arith.constant 0 : index
    %3 = vector.load %arg3[%c0_3, %c0_4] : memref<32x1xf32, #tpu.memory_space<vmem>>, vector<32x1xf32>
    %4 = vector.broadcast %3 : vector<32x1xf32> to vector<32x256xf32>
    %5 = arith.addf %2, %4 : vector<32x256xf32>
    %cst_5 = arith.constant 0.000000e+00 : f32
    %6 = vector.broadcast %cst_5 : f32 to vector<32x256xf32>
    %7 = arith.maximumf %5, %6 : vector<32x256xf32>
    %c0_6 = arith.constant 0 : index
    %c0_7 = arith.constant 0 : index
    %8 = vector.load %arg4[%c0_6, %c0_7] : memref<32x32xf32, #tpu.memory_space<vmem>>, vector<32x32xf32>
    %c0_8 = arith.constant 0 : index
    %c0_9 = arith.constant 0 : index
    %9 = vector.load %arg5[%c0_8, %c0_9] : memref<32x1xf32, #tpu.memory_space<vmem>>, vector<32x1xf32>
    %cst_10 = arith.constant dense<0.000000e+00> : vector<32x256xf32>
    %10 = tpu.matmul %8, %7, %cst_10 {dimension_numbers = #tpu.dot_dimension_numbers<[1], [0], [0], [1], [0, 0, 1, 1], [], []>} : vector<32x32xf32>, vector<32x256xf32>, vector<32x256xf32> -> vector<32x256xf32>
    %11 = vector.broadcast %9 : vector<32x1xf32> to vector<32x256xf32>
    %12 = arith.addf %10, %11 : vector<32x256xf32>
    %cst_11 = arith.constant 0.000000e+00 : f32
    %13 = vector.broadcast %cst_11 : f32 to vector<32x256xf32>
    %14 = arith.maximumf %12, %13 : vector<32x256xf32>
    %c0_12 = arith.constant 0 : index
    %c0_13 = arith.constant 0 : index
    %15 = vector.load %arg6[%c0_12, %c0_13] : memref<1x32xf32, #tpu.memory_space<vmem>>, vector<1x32xf32>
    %c0_14 = arith.constant 0 : index
    %c0_15 = arith.constant 0 : index
    %16 = vector.load %arg7[%c0_14, %c0_15] : memref<1x1xf32, #tpu.memory_space<vmem>>, vector<1x1xf32>
    %cst_16 = arith.constant dense<0.000000e+00> : vector<1x256xf32>
    %17 = tpu.matmul %15, %14, %cst_16 {dimension_numbers = #tpu.dot_dimension_numbers<[1], [0], [0], [1], [0, 0, 1, 1], [], []>} : vector<1x32xf32>, vector<32x256xf32>, vector<1x256xf32> -> vector<1x256xf32>
    %18 = vector.broadcast %16 : vector<1x1xf32> to vector<1x256xf32>
    %19 = arith.addf %17, %18 : vector<1x256xf32>
    %c0_17 = arith.constant 0 : index
    %c0_18 = arith.constant 0 : index
    %20 = vector.load %arg8[%c0_17, %c0_18] : memref<1x256xf32, #tpu.memory_space<vmem>>, vector<1x256xf32>
    tpu.vector_store %arg8[%c0_17, %c0_18], %19 {strides = array<i32>} : memref<1x256xf32, #tpu.memory_space<vmem>>, vector<1x256xf32>,
    return
  }
  func.func @transform_0(%arg0: i32) -> (i32, i32) {
    %c0_i32 = arith.constant 0 : i32
    %c0_i32_0 = arith.constant 0 : i32
    return %arg0, %c0_i32 : i32, i32
  }
  func.func @transform_1(%arg0: i32) -> (i32, i32) {
    %c0_i32 = arith.constant 0 : i32
    %c0_i32_0 = arith.constant 0 : i32
    %c0_i32_1 = arith.constant 0 : i32
    return %c0_i32, %c0_i32_0 : i32, i32
  }
  func.func @transform_2(%arg0: i32) -> (i32, i32) {
    %c0_i32 = arith.constant 0 : i32
    %c0_i32_0 = arith.constant 0 : i32
    %c0_i32_1 = arith.constant 0 : i32
    return %c0_i32, %c0_i32_0 : i32, i32
  }
  func.func @transform_3(%arg0: i32) -> (i32, i32) {
    %c0_i32 = arith.constant 0 : i32
    %c0_i32_0 = arith.constant 0 : i32
    %c0_i32_1 = arith.constant 0 : i32
    return %c0_i32, %c0_i32_0 : i32, i32
  }
  func.func @transform_4(%arg0: i32) -> (i32, i32) {
    %c0_i32 = arith.constant 0 : i32
    %c0_i32_0 = arith.constant 0 : i32
    %c0_i32_1 = arith.constant 0 : i32
    return %c0_i32, %c0_i32_0 : i32, i32
  }
  func.func @transform_5(%arg0: i32) -> (i32, i32) {
    %c0_i32 = arith.constant 0 : i32
    %c0_i32_0 = arith.constant 0 : i32
    %c0_i32_1 = arith.constant 0 : i32
    return %c0_i32, %c0_i32_0 : i32, i32
  }
  func.func @transform_6(%arg0: i32) -> (i32, i32) {
    %c0_i32 = arith.constant 0 : i32
    %c0_i32_0 = arith.constant 0 : i32
    %c0_i32_1 = arith.constant 0 : i32
    return %c0_i32, %c0_i32_0 : i32, i32
  }
  func.func @transform_7(%arg0: i32) -> (i32, i32) {
    %c0_i32 = arith.constant 0 : i32
    %c0_i32_0 = arith.constant 0 : i32
    return %c0_i32, %arg0 : i32, i32
  }
}

</mosaic_0001>

<llo_original>
// kernel: tpu_custom_call.1
$region0: #{tpu_custom_call.1}
  #allocation0 [shape = 'u32[]', space=smem, size = 0x4, offset = 0x4, fixed_abs, tag = 'smem constant byte address 0x4 - core index']
  #allocation1 [shape = 'u32[144,128]{1,0:T(1,128)}', space=vmem, size = 0x12000, scoped, tag = 'internal scratch']
  #allocation2 [shape = 'f32[1,1]{1,0:T(1,128)S(1)}', space=vmem, size = 0x200, scoped, tag = 'scoped memory for tpu_custom_call.1']
  %s0 = inlined_call_operand.vmem [shape: f32[512,4], index: 0, kind: input, shape index: {}]
  %s1 = inlined_call_operand.vmem [shape: f32[32,4], index: 1, kind: input, shape index: {}]
  %s2 = inlined_call_operand.vmem [shape: f32[32,1], index: 2, kind: input, shape index: {}]
  %s3 = inlined_call_operand.vmem [shape: f32[32,32], index: 3, kind: input, shape index: {}]
  %s4 = inlined_call_operand.vmem [shape: f32[32,1], index: 4, kind: input, shape index: {}]
  %s5 = inlined_call_operand.vmem [shape: f32[1,32], index: 5, kind: input, shape index: {}]
  %s6 = inlined_call_operand.<no memory space> [shape: f32[1,1], index: 6, kind: input, shape index: {}]
  %s7 = inlined_call_operand.hbm [shape: f32[1,512], index: 7, kind: output, shape index: {}]
  %s8 = sld [smem:[#allocation0]]
  $region61: #{tpu_custom_call.1} parent=0
    _
  %s10 = ssub.s32 1, %s8
  %s11 = scalar_select 0, %s10, %s8
  %v12 = vstv %s6
  %13 = vst [vmem:[#allocation2] sm:$0x1] %v12
  $region1: #{tpu_custom_call.1} parent=0
    #allocation3 [shape = 'u8[2048]{0}', space=vmem, size = 0x800, scoped, tag = 'output window, operand 0']
    #allocation4 [shape = 's32[2]{0}', space=sflag, size = 0x8, scoped, tag = 'scoped memory for tpu_custom_call.1']
    %14 = vsyncpa [#allocation4], 0
    %s15 = scalar_lea.sflag [#allocation4], 1
    %16 = vsyncpa %s15, 0
    loop: start=0, step=1, limit=4
    $region2: #{tpu_custom_call.1} parent=1 // loop_pre_header
      _
    $region3: #{tpu_custom_call.1} parent=1 // loop_header
      %s18 = sphi 0, %s22
      %p19 = scmp.ge.s32.totalorder %s18, 4
      %s28 = sphi 0, %s30
      %s31 = sphi 0, %s28
      %s32 = sphi 0, %s31
      %s48 = sphi 0, %s32
      %s52 = sphi 0, %s52
      %s54 = sphi 0, %s52
      %s55 = sphi 0, %s54
      %s69 = sphi 0, %s55
      %s73 = sphi 0, %s73
      %s75 = sphi 0, %s73
      %s76 = sphi 0, %s75
      %s90 = sphi 0, %s76
      %s94 = sphi 0, %s94
      %s96 = sphi 0, %s94
      %s97 = sphi 0, %s96
      %s111 = sphi 0, %s97
      %s115 = sphi 0, %s115
      %s117 = sphi 0, %s115
      %s118 = sphi 0, %s117
      %s132 = sphi 0, %s118
      %s136 = sphi 0, %s136
      %s138 = sphi 0, %s136
      %s139 = sphi 0, %s138
      %s153 = sphi 0, %s139
      %s157 = sphi 0, %s157
      %s159 = sphi 0, %s157
      %s160 = sphi 0, %s159
      %s174 = sphi 0, %s160
      %s180 = sphi 0, %s182
      %s183 = sphi 0, %s180
      %s184 = sphi 0, %s183
      %s200 = sphi 0, %s184
    $region4: #{tpu_custom_call.1} parent=1 // loop_header_branch
      %21 = sbr.rel (%p19) target = $region8
    $region5: #{tpu_custom_call.1} parent=1 // loop_body
      %s23 = ssub.s32 %s18, 1
      %s24 = ssub.s32 %s18, 2
      %s25 = sadd.s32 %s18, 1
      %s26 = ssub.s32 %s18, %s25
      %p27 = scmp.eq.s32.totalorder %s26, 0
      %s29 = sadd.s32 %s28, 1
      %s30 = scalar_select %p27, %s28, %s29
      %p33 = pneg %p27
      %p34 = scmp.eq.s32.totalorder %s18, 1
      %p35 = por %p33, %p34
      %p36 = scmp.ne.s32.totalorder %s28, %s31
      %p37 = scmp.eq.s32.totalorder %s18, 0
      %p38 = por %p36, %p37
      %p39 = scmp.ne.s32.totalorder %s28, %s31
      %p40 = scmp.eq.s32.totalorder %s23, 1
      %p41 = por %p39, %p40
      %p42 = scmp.ne.s32.totalorder %s31, %s32
      %p43 = scmp.eq.s32.totalorder %s23, 0
      %p44 = por %p42, %p43
      %p45 = scmp.ne.s32.totalorder %s31, %s32
      %p46 = scmp.eq.s32.totalorder %s24, 1
      %p47 = por %p45, %p46
      %p49 = scmp.ne.s32.totalorder %s32, %s48
      %p50 = scmp.eq.s32.totalorder %s24, 0
      %p51 = por %p49, %p50
      %s53 = sadd.s32 %s52, 1
      %p56 = scmp.eq.s32.totalorder %s18, 1
      %p57 = scmp.ne.s32.totalorder %s52, %s54
      %p58 = scmp.eq.s32.totalorder %s18, 0
      %p59 = por %p57, %p58
      %p60 = scmp.ne.s32.totalorder %s52, %s54
      %p61 = scmp.eq.s32.totalorder %s23, 1
      %p62 = por %p60, %p61
      %p63 = scmp.ne.s32.totalorder %s54, %s55
      %p64 = scmp.eq.s32.totalorder %s23, 0
      %p65 = por %p63, %p64
      %p66 = scmp.ne.s32.totalorder %s54, %s55
      %p67 = scmp.eq.s32.totalorder %s24, 1
      %p68 = por %p66, %p67
      %p70 = scmp.ne.s32.totalorder %s55, %s69
      %p71 = scmp.eq.s32.totalorder %s24, 0
      %p72 = por %p70, %p71
      %s74 = sadd.s32 %s73, 1
      %p77 = scmp.eq.s32.totalorder %s18, 1
      %p78 = scmp.ne.s32.totalorder %s73, %s75
      %p79 = scmp.eq.s32.totalorder %s18, 0
      %p80 = por %p78, %p79
      %p81 = scmp.ne.s32.totalorder %s73, %s75
      %p82 = scmp.eq.s32.totalorder %s23, 1
      %p83 = por %p81, %p82
      %p84 = scmp.ne.s32.totalorder %s75, %s76
      %p85 = scmp.eq.s32.totalorder %s23, 0
      %p86 = por %p84, %p85
      %p87 = scmp.ne.s32.totalorder %s75, %s76
      %p88 = scmp.eq.s32.totalorder %s24, 1
      %p89 = por %p87, %p88
      %p91 = scmp.ne.s32.totalorder %s76, %s90
      %p92 = scmp.eq.s32.totalorder %s24, 0
      %p93 = por %p91, %p92
      %s95 = sadd.s32 %s94, 1
      %p98 = scmp.eq.s32.totalorder %s18, 1
      %p99 = scmp.ne.s32.totalorder %s94, %s96
      %p100 = scmp.eq.s32.totalorder %s18, 0
      %p101 = por %p99, %p100
      %p102 = scmp.ne.s32.totalorder %s94, %s96
      %p103 = scmp.eq.s32.totalorder %s23, 1
      %p104 = por %p102, %p103
      %p105 = scmp.ne.s32.totalorder %s96, %s97
      %p106 = scmp.eq.s32.totalorder %s23, 0
      %p107 = por %p105, %p106
      %p108 = scmp.ne.s32.totalorder %s96, %s97
      %p109 = scmp.eq.s32.totalorder %s24, 1
      %p110 = por %p108, %p109
      %p112 = scmp.ne.s32.totalorder %s97, %s111
      %p113 = scmp.eq.s32.totalorder %s24, 0
      %p114 = por %p112, %p113
      %s116 = sadd.s32 %s115, 1
      %p119 = scmp.eq.s32.totalorder %s18, 1
      %p120 = scmp.ne.s32.totalorder %s115, %s117
      %p121 = scmp.eq.s32.totalorder %s18, 0
      %p122 = por %p120, %p121
      %p123 = scmp.ne.s32.totalorder %s115, %s117
      %p124 = scmp.eq.s32.totalorder %s23, 1
      %p125 = por %p123, %p124
      %p126 = scmp.ne.s32.totalorder %s117, %s118
      %p127 = scmp.eq.s32.totalorder %s23, 0
      %p128 = por %p126, %p127
      %p129 = scmp.ne.s32.totalorder %s117, %s118
      %p130 = scmp.eq.s32.totalorder %s24, 1
      %p131 = por %p129, %p130
      %p133 = scmp.ne.s32.totalorder %s118, %s132
      %p134 = scmp.eq.s32.totalorder %s24, 0
      %p135 = por %p133, %p134
      %s137 = sadd.s32 %s136, 1
      %p140 = scmp.eq.s32.totalorder %s18, 1
      %p141 = scmp.ne.s32.totalorder %s136, %s138
      %p142 = scmp.eq.s32.totalorder %s18, 0
      %p143 = por %p141, %p142
      %p144 = scmp.ne.s32.totalorder %s136, %s138
      %p145 = scmp.eq.s32.totalorder %s23, 1
      %p146 = por %p144, %p145
      %p147 = scmp.ne.s32.totalorder %s138, %s139
      %p148 = scmp.eq.s32.totalorder %s23, 0
      %p149 = por %p147, %p148
      %p150 = scmp.ne.s32.totalorder %s138, %s139
      %p151 = scmp.eq.s32.totalorder %s24, 1
      %p152 = por %p150, %p151
      %p154 = scmp.ne.s32.totalorder %s139, %s153
      %p155 = scmp.eq.s32.totalorder %s24, 0
      %p156 = por %p154, %p155
      %s158 = sadd.s32 %s157, 1
      %p161 = scmp.eq.s32.totalorder %s18, 1
      %p162 = scmp.ne.s32.totalorder %s157, %s159
      %p163 = scmp.eq.s32.totalorder %s18, 0
      %p164 = por %p162, %p163
      %p165 = scmp.ne.s32.totalorder %s157, %s159
      %p166 = scmp.eq.s32.totalorder %s23, 1
      %p167 = por %p165, %p166
      %p168 = scmp.ne.s32.totalorder %s159, %s160
      %p169 = scmp.eq.s32.totalorder %s23, 0
      %p170 = por %p168, %p169
      %p171 = scmp.ne.s32.totalorder %s159, %s160
      %p172 = scmp.eq.s32.totalorder %s24, 1
      %p173 = por %p171, %p172
      %p175 = scmp.ne.s32.totalorder %s160, %s174
      %p176 = scmp.eq.s32.totalorder %s24, 0
      %p177 = por %p175, %p176
      %s178 = ssub.s32 %s18, %s25
      %p179 = scmp.eq.s32.totalorder %s178, 0
      %s181 = sadd.s32 %s180, 1
      %s182 = scalar_select %p179, %s180, %s181
      %p185 = pneg %p179
      %p186 = scmp.eq.s32.totalorder %s18, 1
      %p187 = por %p185, %p186
      %p188 = scmp.ne.s32.totalorder %s180, %s183
      %p189 = scmp.eq.s32.totalorder %s18, 0
      %p190 = por %p188, %p189
      %p191 = scmp.ne.s32.totalorder %s180, %s183
      %p192 = scmp.eq.s32.totalorder %s23, 1
      %p193 = por %p191, %p192
      %p194 = scmp.ne.s32.totalorder %s183, %s184
      %p195 = scmp.eq.s32.totalorder %s23, 0
      %p196 = por %p194, %p195
      %p197 = scmp.ne.s32.totalorder %s183, %s184
      %p198 = scmp.eq.s32.totalorder %s24, 1
      %p199 = por %p197, %p198
      %p201 = scmp.ne.s32.totalorder %s184, %s200
      %p202 = scmp.eq.s32.totalorder %s24, 0
      %p203 = por %p201, %p202
      %p204 = scmp.le.s32.totalorder 1, %s18
      %p205 = scmp.lt.s32.totalorder %s18, 3
      %p206 = pnand %p204, %p205
      %p207 = pneg %p206
      // Predicated region
      $region9: #{tpu_custom_call.1} parent=5 // pred_check
        _
      $region10: #{tpu_custom_call.1} parent=5 // pred_check_branch
        %209 = sbr.rel (%p206) target = $region12
      $region11: #{tpu_custom_call.1} parent=5 // pred_region
        %s210 = ssub.s32 %s18, 1
        // Predicated region
        $region13: #{tpu_custom_call.1} parent=11 // pred_check
          %p211 = pneg %p65
        $region14: #{tpu_custom_call.1} parent=11 // pred_check_branch
          %213 = sbr.rel (%p211) target = $region16
        $region15: #{tpu_custom_call.1} parent=11 // pred_region
          _
        $region16: #{tpu_custom_call.1} parent=11 // pred_fallthru
          _
        // Predicated region
        $region17: #{tpu_custom_call.1} parent=11 // pred_check
          %p214 = pneg %p86
        $region18: #{tpu_custom_call.1} parent=11 // pred_check_branch
          %216 = sbr.rel (%p214) target = $region20
        $region19: #{tpu_custom_call.1} parent=11 // pred_region
          _
        $region20: #{tpu_custom_call.1} parent=11 // pred_fallthru
          _
        // Predicated region
        $region21: #{tpu_custom_call.1} parent=11 // pred_check
          %p217 = pneg %p107
        $region22: #{tpu_custom_call.1} parent=11 // pred_check_branch
          %219 = sbr.rel (%p217) target = $region24
        $region23: #{tpu_custom_call.1} parent=11 // pred_region
          _
        $region24: #{tpu_custom_call.1} parent=11 // pred_fallthru
          _
        // Predicated region
        $region25: #{tpu_custom_call.1} parent=11 // pred_check
          %p220 = pneg %p128
        $region26: #{tpu_custom_call.1} parent=11 // pred_check_branch
          %222 = sbr.rel (%p220) target = $region28
        $region27: #{tpu_custom_call.1} parent=11 // pred_region
          _
        $region28: #{tpu_custom_call.1} parent=11 // pred_fallthru
          _
        // Predicated region
        $region29: #{tpu_custom_call.1} parent=11 // pred_check
          %p223 = pneg %p149
        $region30: #{tpu_custom_call.1} parent=11 // pred_check_branch
          %225 = sbr.rel (%p223) target = $region32
        $region31: #{tpu_custom_call.1} parent=11 // pred_region
          _
        $region32: #{tpu_custom_call.1} parent=11 // pred_fallthru
          _
        // Predicated region
        $region33: #{tpu_custom_call.1} parent=11 // pred_check
          %p226 = pneg %p170
        $region34: #{tpu_custom_call.1} parent=11 // pred_check_branch
          %228 = sbr.rel (%p226) target = $region36
        $region35: #{tpu_custom_call.1} parent=11 // pred_region
          _
        $region36: #{tpu_custom_call.1} parent=11 // pred_fallthru
          _
      $region12: #{tpu_custom_call.1} parent=5 // pred_fallthru
        _
      %p229 = scmp.lt.s32.totalorder %s18, 2
      // Predicated region
      $region37: #{tpu_custom_call.1} parent=5 // pred_check
        %p230 = pneg %p229
      $region38: #{tpu_custom_call.1} parent=5 // pred_check_branch
        %232 = sbr.rel (%p230) target = $region40
      $region39: #{tpu_custom_call.1} parent=5 // pred_region
        // Predicated region
        $region41: #{tpu_custom_call.1} parent=39 // pred_check
          %p233 = pneg %p38
        $region42: #{tpu_custom_call.1} parent=39 // pred_check_branch
          %235 = sbr.rel (%p233) target = $region44
        $region43: #{tpu_custom_call.1} parent=39 // pred_region
          %s236 = smul.u32 32, %s18
          %p237 = scmp.lt.s32.totalorder %s236, 63
          %s238 = scalar_select %p237, %s236, 63
          %s239 = smul.addr %s238, 8
          %s240 = scalar_lea.vmem %s0, %s239
          %s241 = smul.u32 32, %s18
        $region44: #{tpu_custom_call.1} parent=39 // pred_fallthru
          _
      $region40: #{tpu_custom_call.1} parent=5 // pred_fallthru
        _
      %p242 = scmp.le.s32.totalorder 1, %s18
      %p243 = scmp.lt.s32.totalorder %s18, 3
      %p244 = pnand %p242, %p243
      %p245 = pneg %p244
      // Predicated region
      $region45: #{tpu_custom_call.1} parent=5 // pred_check
        _
      $region46: #{tpu_custom_call.1} parent=5 // pred_check_branch
        %247 = sbr.rel (%p244) target = $region48
      $region47: #{tpu_custom_call.1} parent=5 // pred_region
        %s248 = ssub.s32 %s18, 1
        %s249 = smul.u32 32, %s23
        %p250 = scmp.lt.s32.totalorder %s249, 63
        %s251 = scalar_select %p250, %s249, 63
        %s252 = smul.addr %s251, 8
        %s253 = scalar_lea.vmem %s0, %s252
        %p254 = pneg %p44
        %p255 = pneg %p41
        %p256 = pneg %p65
        %p257 = pneg %p62
        %p258 = pneg %p86
        %p259 = pneg %p83
        %p260 = pneg %p107
        %p261 = pneg %p104
        %p262 = pneg %p128
        %p263 = pneg %p125
        %p264 = pneg %p149
        %p265 = pneg %p146
        %p266 = pneg %p170
        %p267 = pneg %p167
        %p268 = pneg %p196
        %p269 = pneg %p193
        %s270 = sand.u32 %s183, 1
        %s271 = scalar_lea.sflag [#allocation4], %s270
        %s272 = sand.u32 %s183, 1
        %s273 = smul.addr %s272, 2
        %s274 = scalar_lea.vmem [#allocation3], %s273
        %s275 = smul.u32 32, %s23
        %p276 = scmp.lt.s32.totalorder %s275, 63
        %s277 = scalar_select %p276, %s275, 63
        %s278 = smul.addr %s277, 8
        %s279 = scalar_lea.vmem %s0, %s278
        %s280 = smul.u32 32, %s23
        %s281 = smul.u32 2, %s23
        %v282 = vld [vmem:[%s279] sm:$0xff]
        %v283 = vld [vmem:[%s279 + $0x8] sm:$0xff]
        %v284 = vld [vmem:[%s279 + $0x10] sm:$0xff]
        %v285 = vld [vmem:[%s279 + $0x18] sm:$0xff]
        %v286 = vld [vmem:[%s279 + $0x20] sm:$0xff]
        %v287 = vld [vmem:[%s279 + $0x28] sm:$0xff]
        %v288 = vld [vmem:[%s279 + $0x30] sm:$0xff]
        %v289 = vld [vmem:[%s279 + $0x38] sm:$0xff]
        %v290 = vld [vmem:[%s279 + $0x40] sm:$0xff]
        %v291 = vld [vmem:[%s279 + $0x48] sm:$0xff]
        %v292 = vld [vmem:[%s279 + $0x50] sm:$0xff]
        %v293 = vld [vmem:[%s279 + $0x58] sm:$0xff]
        %v294 = vld [vmem:[%s279 + $0x60] sm:$0xff]
        %v295 = vld [vmem:[%s279 + $0x68] sm:$0xff]
        %v296 = vld [vmem:[%s279 + $0x70] sm:$0xff]
        %v297 = vld [vmem:[%s279 + $0x78] sm:$0xff]
        %v298 = vld [vmem:[%s279 + $0x80] sm:$0xff]
        %v299 = vld [vmem:[%s279 + $0x88] sm:$0xff]
        %v300 = vld [vmem:[%s279 + $0x90] sm:$0xff]
        %v301 = vld [vmem:[%s279 + $0x98] sm:$0xff]
        %v302 = vld [vmem:[%s279 + $0xa0] sm:$0xff]
        %v303 = vld [vmem:[%s279 + $0xa8] sm:$0xff]
        %v304 = vld [vmem:[%s279 + $0xb0] sm:$0xff]
        %v305 = vld [vmem:[%s279 + $0xb8] sm:$0xff]
        %v306 = vld [vmem:[%s279 + $0xc0] sm:$0xff]
        %v307 = vld [vmem:[%s279 + $0xc8] sm:$0xff]
        %v308 = vld [vmem:[%s279 + $0xd0] sm:$0xff]
        %v309 = vld [vmem:[%s279 + $0xd8] sm:$0xff]
        %v310 = vld [vmem:[%s279 + $0xe0] sm:$0xff]
        %v311 = vld [vmem:[%s279 + $0xe8] sm:$0xff]
        %v312 = vld [vmem:[%s279 + $0xf0] sm:$0xff]
        %v313 = vld [vmem:[%s279 + $0xf8] sm:$0xff]
        %v314 = vld [vmem:[%s1] sm:$0xff]
        %v315 = vld [vmem:[%s1 + $0x8] sm:$0xff]
        %v316 = vld [vmem:[%s1 + $0x10] sm:$0xff]
        %v317 = vld [vmem:[%s1 + $0x18] sm:$0xff]
        %v318 = vld [vmem:[%s2] sm:$0xff]
        %v319 = vld [vmem:[%s2 + $0x8] sm:$0xff]
        %v320 = vld [vmem:[%s2 + $0x10] sm:$0xff]
        %v321 = vld [vmem:[%s2 + $0x18] sm:$0xff]
        %323 = vset.pattern.permute.xlu0 0
        %324 = vperm.xlu0 %323, %v318
        %v325 = vpop.permute.xlu0 %324
        %328 = vset.pattern.permute.xlu0 0
        %329 = vperm.xlu0 %328, %v319
        %v330 = vpop.permute.xlu0 %329
        %333 = vset.pattern.permute.xlu0 0
        %334 = vperm.xlu0 %333, %v320
        %v335 = vpop.permute.xlu0 %334
        %338 = vset.pattern.permute.xlu0 0
        %339 = vperm.xlu0 %338, %v321
        %v340 = vpop.permute.xlu0 %339
        %vm342 = vcmask 31744
        %v344 = vsel %vm342, %v314, 0
        %v347 = vsel %vm342, %v315, 0
        %v350 = vsel %vm342, %v316, 0
        %v353 = vsel %vm342, %v317, 0
        %v356 = vsel %vm342, %v282, 0
        %v359 = vsel %vm342, %v283, 0
        %v362 = vsel %vm342, %v284, 0
        %v365 = vsel %vm342, %v285, 0
        %v368 = vsel %vm342, %v286, 0
        %v371 = vsel %vm342, %v287, 0
        %v374 = vsel %vm342, %v288, 0
        %v377 = vsel %vm342, %v289, 0
        %v380 = vsel %vm342, %v290, 0
        %v383 = vsel %vm342, %v291, 0
        %v386 = vsel %vm342, %v292, 0
        %v389 = vsel %vm342, %v293, 0
        %v392 = vsel %vm342, %v294, 0
        %v395 = vsel %vm342, %v295, 0
        %v398 = vsel %vm342, %v296, 0
        %v401 = vsel %vm342, %v297, 0
        %v404 = vsel %vm342, %v298, 0
        %v407 = vsel %vm342, %v299, 0
        %v410 = vsel %vm342, %v300, 0
        %v413 = vsel %vm342, %v301, 0
        %v416 = vsel %vm342, %v302, 0
        %v419 = vsel %vm342, %v303, 0
        %v422 = vsel %vm342, %v304, 0
        %v425 = vsel %vm342, %v305, 0
        %v428 = vsel %vm342, %v306, 0
        %v431 = vsel %vm342, %v307, 0
        %v434 = vsel %vm342, %v308, 0
        %v437 = vsel %vm342, %v309, 0
        %v440 = vsel %vm342, %v310, 0
        %v443 = vsel %vm342, %v311, 0
        %v446 = vsel %vm342, %v312, 0
        %v449 = vsel %vm342, %v313, 0
        %451 = vmatprep.subr.mxu0 0.0
        %452 = vmatpush1.xpose.msra.mxu0 %v356
        %453 = vmatprep.subr.mxu0 0.0
        %454 = vmatpush1.xpose.msra.mxu0 %v359
        %455 = vmatprep.subr.mxu0 0.0
        %456 = vmatpush1.xpose.msra.mxu0 %v362
        %457 = vmatprep.subr.mxu0 0.0
        %458 = vmatpush1.xpose.msra.mxu0 %v365
        %459 = vmatprep.subr.mxu0 0.0
        %460 = vmatpush1.xpose.msra.mxu0 %v368
        %461 = vmatprep.subr.mxu0 0.0
        %462 = vmatpush1.xpose.msra.mxu0 %v371
        %463 = vmatprep.subr.mxu0 0.0
        %464 = vmatpush1.xpose.msra.mxu0 %v374
        %465 = vmatprep.subr.mxu0 0.0
        %466 = vmatpush1.xpose.msra.mxu0 %v377
        %467 = vmatprep.subr.mxu0 0.0
        %468 = vmatpush1.xpose.msra.mxu0 %v380
        %469 = vmatprep.subr.mxu0 0.0
        %470 = vmatpush1.xpose.msra.mxu0 %v383
        %471 = vmatprep.subr.mxu0 0.0
        %472 = vmatpush1.xpose.msra.mxu0 %v386
        %473 = vmatprep.subr.mxu0 0.0
        %474 = vmatpush1.xpose.msra.mxu0 %v389
        %475 = vmatprep.subr.mxu0 0.0
        %476 = vmatpush1.xpose.msra.mxu0 %v392
        %477 = vmatprep.subr.mxu0 0.0
        %478 = vmatpush1.xpose.msra.mxu0 %v395
        %479 = vmatprep.subr.mxu0 0.0
        %480 = vmatpush1.xpose.msra.mxu0 %v398
        %481 = vmatprep.subr.mxu0 0.0
        %482 = vmatpush1.xpose.msra.mxu0 %v401
        %483 = vmatprep.subr.mxu0 0.0
        %484 = vmatpush1.xpose.msra.mxu0 %v404
        %485 = vmatprep.subr.mxu0 0.0
        %486 = vmatpush1.xpose.msra.mxu0 %v407
        %487 = vmatprep.subr.mxu0 0.0
        %488 = vmatpush1.xpose.msra.mxu0 %v410
        %489 = vmatprep.subr.mxu0 0.0
        %490 = vmatpush1.xpose.msra.mxu0 %v413
        %491 = vmatprep.subr.mxu0 0.0
        %492 = vmatpush1.xpose.msra.mxu0 %v416
        %493 = vmatprep.subr.mxu0 0.0
        %494 = vmatpush1.xpose.msra.mxu0 %v419
        %495 = vmatprep.subr.mxu0 0.0
        %496 = vmatpush1.xpose.msra.mxu0 %v422
        %497 = vmatprep.subr.mxu0 0.0
        %498 = vmatpush1.xpose.msra.mxu0 %v425
        %499 = vmatprep.subr.mxu0 0.0
        %500 = vmatpush1.xpose.msra.mxu0 %v428
        %501 = vmatprep.subr.mxu0 0.0
        %502 = vmatpush1.xpose.msra.mxu0 %v431
        %503 = vmatprep.subr.mxu0 0.0
        %504 = vmatpush1.xpose.msra.mxu0 %v434
        %505 = vmatprep.subr.mxu0 0.0
        %506 = vmatpush1.xpose.msra.mxu0 %v437
        %507 = vmatprep.subr.mxu0 0.0
        %508 = vmatpush1.xpose.msra.mxu0 %v440
        %509 = vmatprep.subr.mxu0 0.0
        %510 = vmatpush1.xpose.msra.mxu0 %v443
        %511 = vmatprep.subr.mxu0 0.0
        %512 = vmatpush1.xpose.msra.mxu0 %v446
        %513 = vmatprep.subr.mxu0 0.0
        %514 = vmatpush1.xpose.msra.mxu0 %v449
        %515 = vmatprep.mubr.f32.mxu0 0.0
        %516 = vmatmul.mubr.f32.gmra.mrb[0].mxu0 %v344
        %v517 = vpop.f32.mrb[0].mxu0
        %v518 = vadd.f32 %v325, %v517
        %v519 = vpop.f32.mrb[0].mxu0
        %v520 = vadd.f32 %v325, %v519
        %521 = vmatprep.mubr.f32.mxu0 0.0
        %522 = vmatmul.mubr.f32.gmra.mrb[0].mxu0 %v347
        %v523 = vpop.f32.mrb[0].mxu0
        %v524 = vadd.f32 %v330, %v523
        %v525 = vpop.f32.mrb[0].mxu0
        %v526 = vadd.f32 %v330, %v525
        %527 = vmatprep.mubr.f32.mxu0 0.0
        %528 = vmatmul.mubr.f32.gmra.mrb[0].mxu0 %v350
        %v529 = vpop.f32.mrb[0].mxu0
        %v530 = vadd.f32 %v335, %v529
        %v531 = vpop.f32.mrb[0].mxu0
        %v532 = vadd.f32 %v335, %v531
        %533 = vmatprep.mubr.f32.mxu0 0.0
        %534 = vmatmul.mubr.f32.gmra.mrb[0].mxu0 %v353
        %v535 = vpop.f32.mrb[0].mxu0
        %v536 = vadd.f32 %v340, %v535
        %v537 = vpop.f32.mrb[0].mxu0
        %v538 = vadd.f32 %v340, %v537
        %539 = vdwg.mxu0
        %v540 = vmax.f32 %v518, 0.0
        %v541 = vmax.f32 %v520, 0.0
        %v542 = vmax.f32 %v524, 0.0
        %v543 = vmax.f32 %v526, 0.0
        %v544 = vmax.f32 %v530, 0.0
        %v545 = vmax.f32 %v532, 0.0
        %v546 = vmax.f32 %v536, 0.0
        %v547 = vmax.f32 %v538, 0.0
        %v548 = vld [vmem:[%s3] sm:$0xff]
        %v549 = vld [vmem:[%s3 + $0x8] sm:$0xff]
        %v550 = vld [vmem:[%s3 + $0x10] sm:$0xff]
        %v551 = vld [vmem:[%s3 + $0x18] sm:$0xff]
        %v552 = vld [vmem:[%s4] sm:$0xff]
        %v553 = vld [vmem:[%s4 + $0x8] sm:$0xff]
        %v554 = vld [vmem:[%s4 + $0x10] sm:$0xff]
        %v555 = vld [vmem:[%s4 + $0x18] sm:$0xff]
        %557 = vset.pattern.permute.xlu0 0
        %558 = vperm.xlu0 %557, %v552
        %v559 = vpop.permute.xlu0 %558
        %562 = vset.pattern.permute.xlu0 0
        %563 = vperm.xlu0 %562, %v553
        %v564 = vpop.permute.xlu0 %563
        %567 = vset.pattern.permute.xlu0 0
        %568 = vperm.xlu0 %567, %v554
        %v569 = vpop.permute.xlu0 %568
        %572 = vset.pattern.permute.xlu0 0
        %573 = vperm.xlu0 %572, %v555
        %v574 = vpop.permute.xlu0 %573
        %vm576 = vcmask 261120
        %v578 = vsel %vm576, %v548, 0
        %v581 = vsel %vm576, %v549, 0
        %v584 = vsel %vm576, %v550, 0
        %v587 = vsel %vm576, %v551, 0
        %589 = vmatprep.subr.mxu0 %v541
        %590 = vmatpush1.msra.mxu0 %v540
        %591 = vmatprep.subr.mxu0 %v543
        %592 = vmatpush1.msra.mxu0 %v542
        %593 = vmatprep.subr.mxu0 %v545
        %594 = vmatpush1.msra.mxu0 %v544
        %595 = vmatprep.subr.mxu0 %v547
        %596 = vmatpush1.msra.mxu0 %v546
        %597 = vmatprep.subr.mxu0 0.0
        %598 = vmatpush1.msra.mxu0 0.0
        %599 = vmatprep.subr.mxu0 0.0
        %600 = vmatpush1.msra.mxu0 0.0
        %601 = vmatprep.subr.mxu0 0.0
        %602 = vmatpush1.msra.mxu0 0.0
        %603 = vmatprep.subr.mxu0 0.0
        %604 = vmatpush1.msra.mxu0 0.0
        %605 = vmatprep.subr.mxu0 0.0
        %606 = vmatpush1.msra.mxu0 0.0
        %607 = vmatprep.subr.mxu0 0.0
        %608 = vmatpush1.msra.mxu0 0.0
        %609 = vmatprep.subr.mxu0 0.0
        %610 = vmatpush1.msra.mxu0 0.0
        %611 = vmatprep.subr.mxu0 0.0
        %612 = vmatpush1.msra.mxu0 0.0
        %613 = vmatprep.subr.mxu0 0.0
        %614 = vmatpush1.msra.mxu0 0.0
        %615 = vmatprep.subr.mxu0 0.0
        %616 = vmatpush1.msra.mxu0 0.0
        %617 = vmatprep.subr.mxu0 0.0
        %618 = vmatpush1.msra.mxu0 0.0
        %619 = vmatprep.subr.mxu0 0.0
        %620 = vmatpush1.msra.mxu0 0.0
        %621 = vmatprep.subr.mxu0 0.0
        %622 = vmatpush1.msra.mxu0 0.0
        %623 = vmatprep.subr.mxu0 0.0
        %624 = vmatpush1.msra.mxu0 0.0
        %625 = vmatprep.subr.mxu0 0.0
        %626 = vmatpush1.msra.mxu0 0.0
        %627 = vmatprep.subr.mxu0 0.0
        %628 = vmatpush1.msra.mxu0 0.0
        %629 = vmatprep.subr.mxu0 0.0
        %630 = vmatpush1.msra.mxu0 0.0
        %631 = vmatprep.subr.mxu0 0.0
        %632 = vmatpush1.msra.mxu0 0.0
        %633 = vmatprep.subr.mxu0 0.0
        %634 = vmatpush1.msra.mxu0 0.0
        %635 = vmatprep.subr.mxu0 0.0
        %636 = vmatpush1.msra.mxu0 0.0
        %637 = vmatprep.subr.mxu0 0.0
        %638 = vmatpush1.msra.mxu0 0.0
        %639 = vmatprep.subr.mxu0 0.0
        %640 = vmatpush1.msra.mxu0 0.0
        %641 = vmatprep.subr.mxu0 0.0
        %642 = vmatpush1.msra.mxu0 0.0
        %643 = vmatprep.subr.mxu0 0.0
        %644 = vmatpush1.msra.mxu0 0.0
        %645 = vmatprep.subr.mxu0 0.0
        %646 = vmatpush1.msra.mxu0 0.0
        %647 = vmatprep.subr.mxu0 0.0
        %648 = vmatpush1.msra.mxu0 0.0
        %649 = vmatprep.subr.mxu0 0.0
        %650 = vmatpush1.msra.mxu0 0.0
        %651 = vmatprep.subr.mxu0 0.0
        %652 = vmatpush1.msra.mxu0 0.0
        %653 = vmatprep.mubr.f32.mxu0 0.0
        %654 = vmatmul.mubr.f32.gmra.mrb[0].mxu0 %v578
        %v655 = vpop.f32.mrb[0].mxu0
        %v656 = vadd.f32 %v559, %v655
        %v657 = vpop.f32.mrb[0].mxu0
        %v658 = vadd.f32 %v559, %v657
        %659 = vmatprep.mubr.f32.mxu0 0.0
        %660 = vmatmul.mubr.f32.gmra.mrb[0].mxu0 %v581
        %v661 = vpop.f32.mrb[0].mxu0
        %v662 = vadd.f32 %v564, %v661
        %v663 = vpop.f32.mrb[0].mxu0
        %v664 = vadd.f32 %v564, %v663
        %665 = vmatprep.mubr.f32.mxu0 0.0
        %666 = vmatmul.mubr.f32.gmra.mrb[0].mxu0 %v584
        %v667 = vpop.f32.mrb[0].mxu0
        %v668 = vadd.f32 %v569, %v667
        %v669 = vpop.f32.mrb[0].mxu0
        %v670 = vadd.f32 %v569, %v669
        %671 = vmatprep.mubr.f32.mxu0 0.0
        %672 = vmatmul.mubr.f32.gmra.mrb[0].mxu0 %v587
        %v673 = vpop.f32.mrb[0].mxu0
        %v674 = vadd.f32 %v574, %v673
        %v675 = vpop.f32.mrb[0].mxu0
        %v676 = vadd.f32 %v574, %v675
        %677 = vdwg.mxu0
        %v678 = vmax.f32 %v656, 0.0
        %v679 = vmax.f32 %v658, 0.0
        %v680 = vmax.f32 %v662, 0.0
        %v681 = vmax.f32 %v664, 0.0
        %v682 = vmax.f32 %v668, 0.0
        %v683 = vmax.f32 %v670, 0.0
        %v684 = vmax.f32 %v674, 0.0
        %v685 = vmax.f32 %v676, 0.0
        %v686 = vld [vmem:[%s5] sm:$0x1]
        %v687 = vld [vmem:[#allocation2] sm:$0x1]
        %689 = vset.pattern.permute.xlu0 0
        %690 = vperm.xlu0 %689, %v687
        %v691 = vpop.permute.xlu0 %690
        %v693 = vlaneseq
        %v694 = vshrl.u32 %v693, 7
        %v695 = vsub.s32 0, %v694
        %v696 = vrot.slane %v691, %v695
        %v698 = vsel %vm576, %v686, 0
        %700 = vmatprep.subr.mxu0 %v679
        %701 = vmatpush1.msra.mxu0 %v678
        %702 = vmatprep.subr.mxu0 %v681
        %703 = vmatpush1.msra.mxu0 %v680
        %704 = vmatprep.subr.mxu0 %v683
        %705 = vmatpush1.msra.mxu0 %v682
        %706 = vmatprep.subr.mxu0 %v685
        %707 = vmatpush1.msra.mxu0 %v684
        %708 = vmatprep.subr.mxu0 0.0
        %709 = vmatpush1.msra.mxu0 0.0
        %710 = vmatprep.subr.mxu0 0.0
        %711 = vmatpush1.msra.mxu0 0.0
        %712 = vmatprep.subr.mxu0 0.0
        %713 = vmatpush1.msra.mxu0 0.0
        %714 = vmatprep.subr.mxu0 0.0
        %715 = vmatpush1.msra.mxu0 0.0
        %716 = vmatprep.subr.mxu0 0.0
        %717 = vmatpush1.msra.mxu0 0.0
        %718 = vmatprep.subr.mxu0 0.0
        %719 = vmatpush1.msra.mxu0 0.0
        %720 = vmatprep.subr.mxu0 0.0
        %721 = vmatpush1.msra.mxu0 0.0
        %722 = vmatprep.subr.mxu0 0.0
        %723 = vmatpush1.msra.mxu0 0.0
        %724 = vmatprep.subr.mxu0 0.0
        %725 = vmatpush1.msra.mxu0 0.0
        %726 = vmatprep.subr.mxu0 0.0
        %727 = vmatpush1.msra.mxu0 0.0
        %728 = vmatprep.subr.mxu0 0.0
        %729 = vmatpush1.msra.mxu0 0.0
        %730 = vmatprep.subr.mxu0 0.0
        %731 = vmatpush1.msra.mxu0 0.0
        %732 = vmatprep.subr.mxu0 0.0
        %733 = vmatpush1.msra.mxu0 0.0
        %734 = vmatprep.subr.mxu0 0.0
        %735 = vmatpush1.msra.mxu0 0.0
        %736 = vmatprep.subr.mxu0 0.0
        %737 = vmatpush1.msra.mxu0 0.0
        %738 = vmatprep.subr.mxu0 0.0
        %739 = vmatpush1.msra.mxu0 0.0
        %740 = vmatprep.subr.mxu0 0.0
        %741 = vmatpush1.msra.mxu0 0.0
        %742 = vmatprep.subr.mxu0 0.0
        %743 = vmatpush1.msra.mxu0 0.0
        %744 = vmatprep.subr.mxu0 0.0
        %745 = vmatpush1.msra.mxu0 0.0
        %746 = vmatprep.subr.mxu0 0.0
        %747 = vmatpush1.msra.mxu0 0.0
        %748 = vmatprep.subr.mxu0 0.0
        %749 = vmatpush1.msra.mxu0 0.0
        %750 = vmatprep.subr.mxu0 0.0
        %751 = vmatpush1.msra.mxu0 0.0
        %752 = vmatprep.subr.mxu0 0.0
        %753 = vmatpush1.msra.mxu0 0.0
        %754 = vmatprep.subr.mxu0 0.0
        %755 = vmatpush1.msra.mxu0 0.0
        %756 = vmatprep.subr.mxu0 0.0
        %757 = vmatpush1.msra.mxu0 0.0
        %758 = vmatprep.subr.mxu0 0.0
        %759 = vmatpush1.msra.mxu0 0.0
        %760 = vmatprep.subr.mxu0 0.0
        %761 = vmatpush1.msra.mxu0 0.0
        %762 = vmatprep.subr.mxu0 0.0
        %763 = vmatpush1.msra.mxu0 0.0
        %764 = vmatprep.mubr.f32.mxu0 0.0
        %765 = vmatmul.mubr.f32.gmra.mrb[0].mxu0 %v698
        %v766 = vpop.f32.mrb[0].mxu0
        %v767 = vadd.f32 %v696, %v766
        %v768 = vpop.f32.mrb[0].mxu0
        %v769 = vadd.f32 %v696, %v768
        %770 = vdwg.mxu0
        %v773 = vcombine.low %v767, %v769
        %v775 = vunpack.c.l.s4 1966171168
        %v776 = vunpack.c.0.s8 %v775
        %v777 = vlaneseq
        %v778 = vshrl.u32 %v777, 7
        %v779 = vsub.s32 %v776, %v778
        %v780 = vrot.slane %v773, %v779
        %v782 = vunpack.c.l.s4 1966171168
        %v783 = vunpack.c.0.s8 %v782
        %v784 = vlaneseq
        %v785 = vshrl.u32 %v784, 7
        %v786 = vsub.s32 %v783, %v785
        %v787 = vrot.slane %v780, %v786
        %v789 = vlaneseq
        %vm790 = vcmp.ge.s32.totalorder %v789, 0
        %vm791 = vcmp.lt.s32.totalorder %v789, 256
        %vm792 = vmand %vm790, %vm791
        %793 = vst.msk [vmem:[%s274] sm:$0x3] %vm792, %v787
        %s794 = sand.u32 %s183, 1
        %s795 = scalar_lea.sflag [#allocation4], %s794
        %s796 = sand.u32 %s183, 1
        %s797 = smul.addr %s796, 2
        %s798 = scalar_lea.vmem [#allocation3], %s797
        // Predicated region
        $region49: #{tpu_custom_call.1} parent=47 // pred_check
          %p799 = pneg %p193
        $region50: #{tpu_custom_call.1} parent=47 // pred_check_branch
          %801 = sbr.rel (%p799) target = $region52
        $region51: #{tpu_custom_call.1} parent=47 // pred_region
          %s802 = smul.u32 2, %s23
          %s804 = ssub.s32 32, 32
          %805 = vsyncadd %s795, %s804
          %s806 = smul.addr %s802, 16
          %s807 = scalar_lea.hbm %s7, %s806
          %s809 = sshll.u32 %s798, 4
          %s810 = int_to_ptr.vmem [resolvable:$true] %s809
          %812 = dma.vmem_to_hbm [thread:$0]  %s810, 32, %s807, %s795
        $region52: #{tpu_custom_call.1} parent=47 // pred_fallthru
          _
      $region48: #{tpu_custom_call.1} parent=5 // pred_fallthru
        _
      %p813 = scmp.le.s32.totalorder 2, %s18
      // Predicated region
      $region53: #{tpu_custom_call.1} parent=5 // pred_check
        %p814 = pneg %p813
      $region54: #{tpu_custom_call.1} parent=5 // pred_check_branch
        %816 = sbr.rel (%p814) target = $region56
      $region55: #{tpu_custom_call.1} parent=5 // pred_region
        %s817 = ssub.s32 %s18, 2
        // Predicated region
        $region57: #{tpu_custom_call.1} parent=55 // pred_check
          %p818 = pneg %p199
        $region58: #{tpu_custom_call.1} parent=55 // pred_check_branch
          %820 = sbr.rel (%p818) target = $region60
        $region59: #{tpu_custom_call.1} parent=55 // pred_region
          %s821 = sand.u32 %s184, 1
          %s822 = scalar_lea.sflag [#allocation4], %s821
          %s823 = sand.u32 %s184, 1
          %s824 = smul.addr %s823, 2
          %s825 = scalar_lea.vmem [#allocation3], %s824
          %826 = dma.done %s822, 32
        $region60: #{tpu_custom_call.1} parent=55 // pred_fallthru
          _
      $region56: #{tpu_custom_call.1} parent=5 // pred_fallthru
        _
    $region6: #{tpu_custom_call.1} parent=1 // loop_footer
      %s22 = sadd.s32 1, %s18
    $region7: #{tpu_custom_call.1} parent=1 // loop_footer_branch
      %17 = sbr.rel target = $region3
    $region8: #{tpu_custom_call.1} parent=1 // loop_exit
      _
    %827 = vsyncpa [#allocation4], 1
    %s828 = scalar_lea.sflag [#allocation4], 1
    %829 = vsyncpa %s828, 1

</llo_original>
